<compile_context>
chip_gen: v5e
topology: v5e:2x2
jax: 0.10.0
libtpu: 0.0.40
codegen_flags: <defaults>
</compile_context>

<pallas_src>
import jax
import jax.numpy as jnp
from jax.experimental import pallas as pl
from jax.experimental.pallas import tpu as pltpu

HIDDEN = 128   # fc1 output dim (from the module definition)
OUT = 1        # fc2 output dim

_LANE = 128
_SUBLANE = 8


def _round_up(x, m):
    return ((x + m - 1) // m) * m


def _mlp_kernel(x_ref, w1_ref, b1_ref, w2_ref, b2_ref, o_ref, acc_ref):
    k = pl.program_id(1)

    @pl.when(k == 0)
    def _():
        acc_ref[...] = jnp.zeros_like(acc_ref)

    # fc1 partial product in transposed layout:
    #   (HIDDEN, block_k) contracted with (block_b, block_k) on the last dims
    #   -> (HIDDEN, block_b), accumulated in f32 (bf16 operands on the MXU).
    acc_ref[...] += jax.lax.dot_general(
        w1_ref[...], x_ref[...],
        dimension_numbers=(((1,), (1,)), ((), ())),
        preferred_element_type=jnp.float32)

    @pl.when(k == pl.num_programs(1) - 1)
    def _():
        h = jnp.maximum(acc_ref[...] + b1_ref[...], 0.0)          # (HIDDEN, block_b)
        # fc2 (out_dim == 1): VPU multiply + sublane (XLU) reduction instead of
        # an N=1 MXU matmul; the result is already a lane-dense (1, block_b) row.
        o = jnp.sum(h * w2_ref[...], axis=0, keepdims=True) + b2_ref[0, 0]
        o_ref[...] = o.astype(o_ref.dtype)


def _choose_tiles(B, D):
    # K tiling: single reduction step for moderate D; tile at 1024 (lane
    # aligned) beyond that so w1 streams through the pipeline instead of
    # sitting resident in VMEM.
    if D <= 2048:
        block_k, d_pad = D, D
    else:
        block_k = 1024
        d_pad = _round_up(D, block_k)

    # Batch tiling: budget ~4 MiB for the double-buffered bf16 x tile plus the
    # f32 accumulator rows -> fits comfortably even in v7x's smaller VMEM.
    if B <= _LANE:
        block_b = _round_up(B, _SUBLANE)          # single batch step
    else:
        per_row = 2 * 2 * block_k + 4 * HIDDEN + 16
        budget = 4 * 1024 * 1024
        cap = max(_LANE, min(1024, (budget // per_row) // _LANE * _LANE))
        block_b = min(cap, _round_up(B, _LANE))   # multiple of 128 -> dense lanes
    b_pad = _round_up(B, block_b)
    return block_b, b_pad, block_k, d_pad


def text_classifier_forward(x, w1, b1, w2, b2):
    """Fused fc1 -> ReLU -> fc2.

    x : [B, D]        float32
    w1: [HIDDEN, D]   float32  (== PyTorch fc1.weight)
    b1: [HIDDEN, 1]   float32  (== fc1.bias[:, None])
    w2: [HIDDEN, 1]   float32  (== fc2.weight.T)
    b2: [1, 1]        float32  (== fc2.bias[None, :])
    returns [B, 1] float32.
    """
    B, D = x.shape
    block_b, b_pad, block_k, d_pad = _choose_tiles(B, D)
    num_b = b_pad // block_b
    num_k = d_pad // block_k

    # bf16 for the dominant HBM/MXU operands; accumulation stays f32.
    x16 = x.astype(jnp.bfloat16)
    w116 = w1.astype(jnp.bfloat16)
    if b_pad != B or d_pad != D:
        x16 = jnp.pad(x16, ((0, b_pad - B), (0, d_pad - D)))
    if d_pad != D:
        w116 = jnp.pad(w116, ((0, 0), (0, d_pad - D)))

    out = pl.pallas_call(
        _mlp_kernel,
        out_shape=jax.ShapeDtypeStruct((1, b_pad), x.dtype),
        grid_spec=pltpu.PrefetchScalarGridSpec(
            num_scalar_prefetch=0,
            grid=(num_b, num_k),
            in_specs=[
                pl.BlockSpec((block_b, block_k), lambda i, k: (i, k)),   # x tile
                pl.BlockSpec((HIDDEN, block_k), lambda i, k: (0, k)),    # w1 tile
                pl.BlockSpec((HIDDEN, 1), lambda i, k: (0, 0)),          # b1 (resident)
                pl.BlockSpec((HIDDEN, 1), lambda i, k: (0, 0)),          # w2 (resident)
                pl.BlockSpec(memory_space=pltpu.MemorySpace.SMEM),       # b2 scalar
            ],
            out_specs=pl.BlockSpec((1, block_b), lambda i, k: (0, i)),   # lane-dense
            scratch_shapes=[pltpu.VMEM((HIDDEN, block_b), jnp.float32)],
        ),
        compiler_params=pltpu.CompilerParams(
            dimension_semantics=("parallel", "arbitrary"),
            vmem_limit_bytes=32 * 1024 * 1024,
        ),
    )(x16, w116, b1, w2, b2)

    # (1, B_pad) lane-dense slab -> (B, 1) column, matching the PyTorch module.
    return out[:, :B].reshape(B, OUT)


def init_params(key, input_dim):
    """nn.Linear-style U(-1/sqrt(fan_in), +1/sqrt(fan_in)) init, kernel layout."""
    k1, k2, k3, k4 = jax.random.split(key, 4)
    bound1 = 1.0 / jnp.sqrt(jnp.float32(input_dim))
    bound2 = 1.0 / jnp.sqrt(jnp.float32(HIDDEN))
    w1 = jax.random.uniform(k1, (HIDDEN, input_dim), jnp.float32, -bound1, bound1)
    b1 = jax.random.uniform(k2, (HIDDEN, 1), jnp.float32, -bound1, bound1)
    w2 = jax.random.uniform(k3, (HIDDEN, OUT), jnp.float32, -bound2, bound2)
    b2 = jax.random.uniform(k4, (1, OUT), jnp.float32, -bound2, bound2)
    return w1, b1, w2, b2


if __name__ == "__main__":
    key = jax.random.PRNGKey(0)
    kx, kp = jax.random.split(key)

    B, D = 8, 32  # small batch, input_dim=32
    x = jax.random.normal(kx, (B, D), jnp.float32)
    w1, b1, w2, b2 = init_params(kp, D)

    out = text_classifier_forward(x, w1, b1, w2, b2)
    out = jax.block_until_ready(out)
    assert out.shape == (B, OUT)

    # Reference (plain JAX, same math as the PyTorch forward) using the same
    # bf16-rounded operands the kernel consumes, with f32 accumulation.
    x16 = x.astype(jnp.bfloat16).astype(jnp.float32)
    w116 = w1.astype(jnp.bfloat16).astype(jnp.float32)
    h = jnp.maximum(x16 @ w116.T + b1.reshape(1, HIDDEN), 0.0)
    ref = h @ w2 + b2
    assert jnp.allclose(out, ref, atol=2e-4, rtol=2e-4), (
        f"max abs err {jnp.max(jnp.abs(out - ref))}")

    print("KERNEL_OK")
</pallas_src>

<mosaic_0001>
module attributes {stable_mosaic.version = 11 : i64} {
  func.func @_mlp_kernel(%arg0: i32, %arg1: i32, %arg2: memref<8x32xbf16, #tpu.memory_space<vmem>>, %arg3: memref<128x32xbf16, #tpu.memory_space<vmem>>, %arg4: memref<128x1xf32, #tpu.memory_space<vmem>>, %arg5: memref<128x1xf32, #tpu.memory_space<vmem>>, %arg6: memref<1x1xf32, #tpu.memory_space<smem>>, %arg7: memref<1x8xf32, #tpu.memory_space<vmem>>, %arg8: memref<128x8xf32, #tpu.memory_space<vmem>>) attributes {dimension_semantics = [#tpu.dimension_semantics<parallel>, #tpu.dimension_semantics<arbitrary>], iteration_bounds = array<i64: 1, 1>, scalar_prefetch = 0 : i64, scratch_operands = 1 : i64, tpu.core_type = #tpu.core_type<tc>, window_params = [{transform_indices = @transform_0, window_bounds = array<i64: 8, 32>}, {transform_indices = @transform_1, window_bounds = array<i64: 128, 32>}, {pipeline_mode = #tpu.pipeline_mode<synchronous>, transform_indices = @transform_2, window_bounds = array<i64: 128, 1>}, {pipeline_mode = #tpu.pipeline_mode<synchronous>, transform_indices = @transform_3, window_bounds = array<i64: 128, 1>}, {transform_indices = @transform_4, window_bounds = array<i64: 1, 1>}, {transform_indices = @transform_5, window_bounds = array<i64: 1, 8>}]} {
    %c0_i32 = arith.constant 0 : i32
    %0 = arith.cmpi eq, %arg1, %c0_i32 : i32
    %1 = arith.extui %0 : i1 to i32
    %c0_i32_0 = arith.constant 0 : i32
    %2 = arith.cmpi ne, %1, %c0_i32_0 : i32
    scf.if %2 {
      %cst_10 = arith.constant 0.000000e+00 : f32
      %12 = vector.broadcast %cst_10 : f32 to vector<128x8xf32>
      %c0_11 = arith.constant 0 : index
      %c0_12 = arith.constant 0 : index
      %13 = vector.load %arg8[%c0_11, %c0_12] : memref<128x8xf32, #tpu.memory_space<vmem>>, vector<128x8xf32>
      tpu.vector_store %arg8[%c0_11, %c0_12], %12 {strides = array<i32>} : memref<128x8xf32, #tpu.memory_space<vmem>>, vector<128x8xf32>,
    } else {
    }
    %c0 = arith.constant 0 : index
    %c0_1 = arith.constant 0 : index
    %3 = vector.load %arg8[%c0, %c0_1] : memref<128x8xf32, #tpu.memory_space<vmem>>, vector<128x8xf32>
    %c0_2 = arith.constant 0 : index
    %c0_3 = arith.constant 0 : index
    %4 = vector.load %arg3[%c0_2, %c0_3] : memref<128x32xbf16, #tpu.memory_space<vmem>>, vector<128x32xbf16>
    %c0_4 = arith.constant 0 : index
    %c0_5 = arith.constant 0 : index
    %5 = vector.load %arg2[%c0_4, %c0_5] : memref<8x32xbf16, #tpu.memory_space<vmem>>, vector<8x32xbf16>
    %cst = arith.constant dense<0.000000e+00> : vector<128x8xf32>
    %6 = tpu.matmul %4, %5, %cst {dimension_numbers = #tpu.dot_dimension_numbers<[1], [1], [0], [0], [0, 0, 1, 0], [], []>} : vector<128x32xbf16>, vector<8x32xbf16>, vector<128x8xf32> -> vector<128x8xf32>
    %7 = arith.addf %3, %6 : vector<128x8xf32>
    %c0_6 = arith.constant 0 : index
    %c0_7 = arith.constant 0 : index
    %8 = vector.load %arg8[%c0_6, %c0_7] : memref<128x8xf32, #tpu.memory_space<vmem>>, vector<128x8xf32>
    tpu.vector_store %arg8[%c0_6, %c0_7], %7 {strides = array<i32>} : memref<128x8xf32, #tpu.memory_space<vmem>>, vector<128x8xf32>,
    %c0_i32_8 = arith.constant 0 : i32
    %9 = arith.cmpi eq, %arg1, %c0_i32_8 : i32
    %10 = arith.extui %9 : i1 to i32
    %c0_i32_9 = arith.constant 0 : i32
    %11 = arith.cmpi ne, %10, %c0_i32_9 : i32
    scf.if %11 {
      %c0_10 = arith.constant 0 : index
      %c0_11 = arith.constant 0 : index
      %12 = vector.load %arg8[%c0_10, %c0_11] : memref<128x8xf32, #tpu.memory_space<vmem>>, vector<128x8xf32>
      %c0_12 = arith.constant 0 : index
      %c0_13 = arith.constant 0 : index
      %13 = vector.load %arg4[%c0_12, %c0_13] : memref<128x1xf32, #tpu.memory_space<vmem>>, vector<128x1xf32>
      %14 = vector.broadcast %13 : vector<128x1xf32> to vector<128x8xf32>
      %15 = arith.addf %12, %14 : vector<128x8xf32>
      %cst_14 = arith.constant 0.000000e+00 : f32
      %16 = vector.broadcast %cst_14 : f32 to vector<128x8xf32>
      %17 = arith.maximumf %15, %16 : vector<128x8xf32>
      %c0_15 = arith.constant 0 : index
      %c0_16 = arith.constant 0 : index
      %18 = vector.load %arg5[%c0_15, %c0_16] : memref<128x1xf32, #tpu.memory_space<vmem>>, vector<128x1xf32>
      %19 = vector.broadcast %18 : vector<128x1xf32> to vector<128x8xf32>
      %20 = arith.mulf %17, %19 : vector<128x8xf32>
      %cst_17 = arith.constant dense<0.000000e+00> : vector<8xf32>
      %21 = vector.multi_reduction <add>, %20, %cst_17 [0] : vector<128x8xf32> to vector<8xf32>
      %22 = vector.shape_cast %21 : vector<8xf32> to vector<1x8xf32>
      %c0_18 = arith.constant 0 : index
      %c0_19 = arith.constant 0 : index
      %23 = memref.load %arg6[%c0_18, %c0_19] : memref<1x1xf32, #tpu.memory_space<smem>>
      %24 = vector.broadcast %23 : f32 to vector<1x8xf32>
      %25 = arith.addf %22, %24 : vector<1x8xf32>
      %c0_20 = arith.constant 0 : index
      %c0_21 = arith.constant 0 : index
      %26 = vector.load %arg7[%c0_20, %c0_21] : memref<1x8xf32, #tpu.memory_space<vmem>>, vector<1x8xf32>
      tpu.vector_store %arg7[%c0_20, %c0_21], %25 {strides = array<i32>} : memref<1x8xf32, #tpu.memory_space<vmem>>, vector<1x8xf32>,
    } else {
    }
    return
  }
  func.func @transform_0(%arg0: i32, %arg1: i32) -> (i32, i32) {
    %c0_i32 = arith.constant 0 : i32
    return %arg0, %arg1 : i32, i32
  }
  func.func @transform_1(%arg0: i32, %arg1: i32) -> (i32, i32) {
    %c0_i32 = arith.constant 0 : i32
    %c0_i32_0 = arith.constant 0 : i32
    return %c0_i32, %arg1 : i32, i32
  }
  func.func @transform_2(%arg0: i32, %arg1: i32) -> (i32, i32) {
    %c0_i32 = arith.constant 0 : i32
    %c0_i32_0 = arith.constant 0 : i32
    %c0_i32_1 = arith.constant 0 : i32
    return %c0_i32, %c0_i32_0 : i32, i32
  }
  func.func @transform_3(%arg0: i32, %arg1: i32) -> (i32, i32) {
    %c0_i32 = arith.constant 0 : i32
    %c0_i32_0 = arith.constant 0 : i32
    %c0_i32_1 = arith.constant 0 : i32
    return %c0_i32, %c0_i32_0 : i32, i32
  }
  func.func @transform_4(%arg0: i32, %arg1: i32) -> (i32, i32) {
    %c0_i32 = arith.constant 0 : i32
    %c0_i32_0 = arith.constant 0 : i32
    %c0_i32_1 = arith.constant 0 : i32
    return %c0_i32, %c0_i32_0 : i32, i32
  }
  func.func @transform_5(%arg0: i32, %arg1: i32) -> (i32, i32) {
    %c0_i32 = arith.constant 0 : i32
    %c0_i32_0 = arith.constant 0 : i32
    return %c0_i32, %arg0 : i32, i32
  }
}

</mosaic_0001>

<llo_original>
// kernel: tpu_custom_call.1
$region0: #{tpu_custom_call.1}
  #allocation0 [shape = 'u32[]', space=smem, size = 0x4, offset = 0x4, fixed_abs, tag = 'smem constant byte address 0x4 - core index']
  #allocation1 [shape = 'u32[72,128]{1,0:T(1,128)}', space=vmem, size = 0x9000, scoped, tag = 'internal scratch']
  #allocation2 [shape = 'f32[128,8]{1,0:T(8,128)}', space=vmem, size = 0x10000, scoped, tag = 'scratch operand']
  #allocation3 [shape = 'f32[1,1]{1,0:T(1,128)S(6)}', space=smem, size = 0x200, scoped, tag = 'scoped memory for tpu_custom_call.1']
  %s0 = inlined_call_operand.vmem [shape: bf16[8,32], index: 0, kind: input, shape index: {}]
  %s1 = inlined_call_operand.vmem [shape: bf16[128,32], index: 1, kind: input, shape index: {}]
  %s2 = inlined_call_operand.vmem [shape: f32[128,1], index: 2, kind: input, shape index: {}]
  %s3 = inlined_call_operand.vmem [shape: f32[128,1], index: 3, kind: input, shape index: {}]
  %s4 = inlined_call_operand.<no memory space> [shape: f32[1,1], index: 4, kind: input, shape index: {}]
  %s5 = inlined_call_operand.hbm [shape: f32[1,8], index: 5, kind: output, shape index: {}]
  %s6 = sld [smem:[#allocation0]]
  $region38: #{tpu_custom_call.1} parent=0
    _
  %s8 = ssub.s32 1, %s6
  %s9 = scalar_select 0, %s8, %s6
  %10 = sst [smem:[#allocation3]] %s4
  $region1: #{tpu_custom_call.1} parent=0
    #allocation4 [shape = 'u8[512]{0}', space=vmem, size = 0x400, scoped, tag = 'output window, operand 0, single buffered']
    #allocation5 [shape = 's32[1]{0}', space=sflag, size = 0x4, scoped, tag = 'scoped memory for tpu_custom_call.1']
    %11 = vsyncpa [#allocation5], 0
    // Predicated region
    $region2: #{tpu_custom_call.1} parent=1 // pred_check
      _
    $region3: #{tpu_custom_call.1} parent=1 // pred_check_branch
      %13 = sbr.rel (0) target = $region5
    $region4: #{tpu_custom_call.1} parent=1 // pred_region
      _
    $region5: #{tpu_custom_call.1} parent=1 // pred_fallthru
      _
    // Predicated region
    $region6: #{tpu_custom_call.1} parent=1 // pred_check
      _
    $region7: #{tpu_custom_call.1} parent=1 // pred_check_branch
      %15 = sbr.rel (0) target = $region9
    $region8: #{tpu_custom_call.1} parent=1 // pred_region
      _
    $region9: #{tpu_custom_call.1} parent=1 // pred_fallthru
      _
    // Predicated region
    $region10: #{tpu_custom_call.1} parent=1 // pred_check
      _
    $region11: #{tpu_custom_call.1} parent=1 // pred_check_branch
      %17 = sbr.rel (0) target = $region13
    $region12: #{tpu_custom_call.1} parent=1 // pred_region
      _
    $region13: #{tpu_custom_call.1} parent=1 // pred_fallthru
      _
    // Predicated region
    $region14: #{tpu_custom_call.1} parent=1 // pred_check
      _
    $region15: #{tpu_custom_call.1} parent=1 // pred_check_branch
      %19 = sbr.rel (0) target = $region17
    $region16: #{tpu_custom_call.1} parent=1 // pred_region
      _
    $region17: #{tpu_custom_call.1} parent=1 // pred_fallthru
      _
    // Predicated region
    $region18: #{tpu_custom_call.1} parent=1 // pred_check
      _
    $region19: #{tpu_custom_call.1} parent=1 // pred_check_branch
      %21 = sbr.rel (0) target = $region21
    $region20: #{tpu_custom_call.1} parent=1 // pred_region
      _
    $region21: #{tpu_custom_call.1} parent=1 // pred_fallthru
      _
    %p23 = scmp.eq.s32.totalorder 0, 0
    // Predicated region
    $region22: #{tpu_custom_call.1} parent=1 // pred_check
      %p24 = pneg %p23
    $region23: #{tpu_custom_call.1} parent=1 // pred_check_branch
      %26 = sbr.rel (%p24) target = $region25
    $region24: #{tpu_custom_call.1} parent=1 // pred_region
      %vm27 = vcmask 64512
      %28 = vst.msk [vmem:[#allocation2] sm:$0xff] %vm27, 0.0
      %29 = vst.msk [vmem:[#allocation2 + $0x8] sm:$0xff] %vm27, 0.0
      %30 = vst.msk [vmem:[#allocation2 + $0x10] sm:$0xff] %vm27, 0.0
      %31 = vst.msk [vmem:[#allocation2 + $0x18] sm:$0xff] %vm27, 0.0
      %32 = vst.msk [vmem:[#allocation2 + $0x20] sm:$0xff] %vm27, 0.0
      %33 = vst.msk [vmem:[#allocation2 + $0x28] sm:$0xff] %vm27, 0.0
      %34 = vst.msk [vmem:[#allocation2 + $0x30] sm:$0xff] %vm27, 0.0
      %35 = vst.msk [vmem:[#allocation2 + $0x38] sm:$0xff] %vm27, 0.0
      %36 = vst.msk [vmem:[#allocation2 + $0x40] sm:$0xff] %vm27, 0.0
      %37 = vst.msk [vmem:[#allocation2 + $0x48] sm:$0xff] %vm27, 0.0
      %38 = vst.msk [vmem:[#allocation2 + $0x50] sm:$0xff] %vm27, 0.0
      %39 = vst.msk [vmem:[#allocation2 + $0x58] sm:$0xff] %vm27, 0.0
      %40 = vst.msk [vmem:[#allocation2 + $0x60] sm:$0xff] %vm27, 0.0
      %41 = vst.msk [vmem:[#allocation2 + $0x68] sm:$0xff] %vm27, 0.0
      %42 = vst.msk [vmem:[#allocation2 + $0x70] sm:$0xff] %vm27, 0.0
      %43 = vst.msk [vmem:[#allocation2 + $0x78] sm:$0xff] %vm27, 0.0
    $region25: #{tpu_custom_call.1} parent=1 // pred_fallthru
      _
    %v44 = vld [vmem:[#allocation2] sm:$0xff]
    %v45 = vld [vmem:[#allocation2 + $0x8] sm:$0xff]
    %v46 = vld [vmem:[#allocation2 + $0x10] sm:$0xff]
    %v47 = vld [vmem:[#allocation2 + $0x18] sm:$0xff]
    %v48 = vld [vmem:[#allocation2 + $0x20] sm:$0xff]
    %v49 = vld [vmem:[#allocation2 + $0x28] sm:$0xff]
    %v50 = vld [vmem:[#allocation2 + $0x30] sm:$0xff]
    %v51 = vld [vmem:[#allocation2 + $0x38] sm:$0xff]
    %v52 = vld [vmem:[#allocation2 + $0x40] sm:$0xff]
    %v53 = vld [vmem:[#allocation2 + $0x48] sm:$0xff]
    %v54 = vld [vmem:[#allocation2 + $0x50] sm:$0xff]
    %v55 = vld [vmem:[#allocation2 + $0x58] sm:$0xff]
    %v56 = vld [vmem:[#allocation2 + $0x60] sm:$0xff]
    %v57 = vld [vmem:[#allocation2 + $0x68] sm:$0xff]
    %v58 = vld [vmem:[#allocation2 + $0x70] sm:$0xff]
    %v59 = vld [vmem:[#allocation2 + $0x78] sm:$0xff]
    %v60 = vld [vmem:[%s1] sm:$0xf]
    %v61 = vld [vmem:[%s1 + $0x4] sm:$0xf]
    %v62 = vld [vmem:[%s1 + $0x8] sm:$0xf]
    %v63 = vld [vmem:[%s1 + $0xc] sm:$0xf]
    %v64 = vld [vmem:[%s1 + $0x10] sm:$0xf]
    %v65 = vld [vmem:[%s1 + $0x14] sm:$0xf]
    %v66 = vld [vmem:[%s1 + $0x18] sm:$0xf]
    %v67 = vld [vmem:[%s1 + $0x1c] sm:$0xf]
    %v68 = vld [vmem:[%s1 + $0x20] sm:$0xf]
    %v69 = vld [vmem:[%s1 + $0x24] sm:$0xf]
    %v70 = vld [vmem:[%s1 + $0x28] sm:$0xf]
    %v71 = vld [vmem:[%s1 + $0x2c] sm:$0xf]
    %v72 = vld [vmem:[%s1 + $0x30] sm:$0xf]
    %v73 = vld [vmem:[%s1 + $0x34] sm:$0xf]
    %v74 = vld [vmem:[%s1 + $0x38] sm:$0xf]
    %v75 = vld [vmem:[%s1 + $0x3c] sm:$0xf]
    %v76 = vld [vmem:[%s0] sm:$0xf]
    %v93 = vunpack.c.l.b16 %v60
    %v94 = vunpack.c.l.b16 %v61
    %v95 = vunpack.c.l.b16 %v62
    %v96 = vunpack.c.l.b16 %v63
    %v97 = vunpack.c.l.b16 %v64
    %v98 = vunpack.c.l.b16 %v65
    %v99 = vunpack.c.l.b16 %v66
    %v100 = vunpack.c.l.b16 %v67
    %v101 = vunpack.c.l.b16 %v68
    %v102 = vunpack.c.l.b16 %v69
    %v103 = vunpack.c.l.b16 %v70
    %v104 = vunpack.c.l.b16 %v71
    %v105 = vunpack.c.l.b16 %v72
    %v106 = vunpack.c.l.b16 %v73
    %v107 = vunpack.c.l.b16 %v74
    %v108 = vunpack.c.l.b16 %v75
    %v109 = vpack.c.b16 %v94, %v93
    %v110 = vpack.c.b16 %v96, %v95
    %v111 = vpack.c.b16 %v98, %v97
    %v112 = vpack.c.b16 %v100, %v99
    %v113 = vpack.c.b16 %v102, %v101
    %v114 = vpack.c.b16 %v104, %v103
    %v115 = vpack.c.b16 %v106, %v105
    %v116 = vpack.c.b16 %v108, %v107
    %vm117 = vcmask 261120
    %v119 = vsel %vm117, %v109, 0
    %v122 = vsel %vm117, %v110, 0
    %v125 = vsel %vm117, %v111, 0
    %v128 = vsel %vm117, %v112, 0
    %v131 = vsel %vm117, %v113, 0
    %v134 = vsel %vm117, %v114, 0
    %v137 = vsel %vm117, %v115, 0
    %v140 = vsel %vm117, %v116, 0
    %v143 = vsel %vm117, %v76, 0
    %145 = vmatpush.bf16.xpose.msra.mxu0 0
    %146 = vmatpush.bf16.xpose.msra.mxu0 0
    %147 = vmatpush.bf16.xpose.msra.mxu0 0
    %148 = vmatpush.bf16.xpose.msra.mxu0 0
    %149 = vmatpush.bf16.xpose.msra.mxu0 0
    %150 = vmatpush.bf16.xpose.msra.mxu0 0
    %151 = vmatpush.bf16.xpose.msra.mxu0 0
    %152 = vmatpush.bf16.xpose.msra.mxu0 %v143
    %153 = vmatmul.bf16.gmra.mxu0 %v119
    %v154 = vpop.f32.mrf.mxu0
    %v155 = vadd.f32 0.0, %v154
    %v156 = vpop.f32.mrf.mxu0
    %v157 = vadd.f32 0.0, %v156
    %158 = vmatmul.bf16.gmra.mxu0 %v122
    %v159 = vpop.f32.mrf.mxu0
    %v160 = vadd.f32 0.0, %v159
    %v161 = vpop.f32.mrf.mxu0
    %v162 = vadd.f32 0.0, %v161
    %163 = vmatmul.bf16.gmra.mxu0 %v125
    %v164 = vpop.f32.mrf.mxu0
    %v165 = vadd.f32 0.0, %v164
    %v166 = vpop.f32.mrf.mxu0
    %v167 = vadd.f32 0.0, %v166
    %168 = vmatmul.bf16.gmra.mxu0 %v128
    %v169 = vpop.f32.mrf.mxu0
    %v170 = vadd.f32 0.0, %v169
    %v171 = vpop.f32.mrf.mxu0
    %v172 = vadd.f32 0.0, %v171
    %173 = vmatmul.bf16.gmra.mxu0 %v131
    %v174 = vpop.f32.mrf.mxu0
    %v175 = vadd.f32 0.0, %v174
    %v176 = vpop.f32.mrf.mxu0
    %v177 = vadd.f32 0.0, %v176
    %178 = vmatmul.bf16.gmra.mxu0 %v134
    %v179 = vpop.f32.mrf.mxu0
    %v180 = vadd.f32 0.0, %v179
    %v181 = vpop.f32.mrf.mxu0
    %v182 = vadd.f32 0.0, %v181
    %183 = vmatmul.bf16.gmra.mxu0 %v137
    %v184 = vpop.f32.mrf.mxu0
    %v185 = vadd.f32 0.0, %v184
    %v186 = vpop.f32.mrf.mxu0
    %v187 = vadd.f32 0.0, %v186
    %188 = vmatmul.bf16.gmra.mxu0 %v140
    %v189 = vpop.f32.mrf.mxu0
    %v190 = vadd.f32 0.0, %v189
    %v191 = vpop.f32.mrf.mxu0
    %v192 = vadd.f32 0.0, %v191
    %193 = vdwg.mxu0
    %v194 = vadd.f32 %v44, %v155
    %v195 = vadd.f32 %v45, %v157
    %v196 = vadd.f32 %v46, %v160
    %v197 = vadd.f32 %v47, %v162
    %v198 = vadd.f32 %v48, %v165
    %v199 = vadd.f32 %v49, %v167
    %v200 = vadd.f32 %v50, %v170
    %v201 = vadd.f32 %v51, %v172
    %v202 = vadd.f32 %v52, %v175
    %v203 = vadd.f32 %v53, %v177
    %v204 = vadd.f32 %v54, %v180
    %v205 = vadd.f32 %v55, %v182
    %v206 = vadd.f32 %v56, %v185
    %v207 = vadd.f32 %v57, %v187
    %v208 = vadd.f32 %v58, %v190
    %v209 = vadd.f32 %v59, %v192
    %vm210 = vcmask 64512
    %211 = vst.msk [vmem:[#allocation2] sm:$0xff] %vm210, %v194
    %212 = vst.msk [vmem:[#allocation2 + $0x8] sm:$0xff] %vm210, %v195
    %213 = vst.msk [vmem:[#allocation2 + $0x10] sm:$0xff] %vm210, %v196
    %214 = vst.msk [vmem:[#allocation2 + $0x18] sm:$0xff] %vm210, %v197
    %215 = vst.msk [vmem:[#allocation2 + $0x20] sm:$0xff] %vm210, %v198
    %216 = vst.msk [vmem:[#allocation2 + $0x28] sm:$0xff] %vm210, %v199
    %217 = vst.msk [vmem:[#allocation2 + $0x30] sm:$0xff] %vm210, %v200
    %218 = vst.msk [vmem:[#allocation2 + $0x38] sm:$0xff] %vm210, %v201
    %219 = vst.msk [vmem:[#allocation2 + $0x40] sm:$0xff] %vm210, %v202
    %220 = vst.msk [vmem:[#allocation2 + $0x48] sm:$0xff] %vm210, %v203
    %221 = vst.msk [vmem:[#allocation2 + $0x50] sm:$0xff] %vm210, %v204
    %222 = vst.msk [vmem:[#allocation2 + $0x58] sm:$0xff] %vm210, %v205
    %223 = vst.msk [vmem:[#allocation2 + $0x60] sm:$0xff] %vm210, %v206
    %224 = vst.msk [vmem:[#allocation2 + $0x68] sm:$0xff] %vm210, %v207
    %225 = vst.msk [vmem:[#allocation2 + $0x70] sm:$0xff] %vm210, %v208
    %226 = vst.msk [vmem:[#allocation2 + $0x78] sm:$0xff] %vm210, %v209
    // Predicated region
    $region26: #{tpu_custom_call.1} parent=1 // pred_check
      %p227 = pneg %p23
    $region27: #{tpu_custom_call.1} parent=1 // pred_check_branch
      %229 = sbr.rel (%p227) target = $region29
    $region28: #{tpu_custom_call.1} parent=1 // pred_region
      %v230 = vld [vmem:[#allocation2] sm:$0xff]
      %v231 = vld [vmem:[#allocation2 + $0x8] sm:$0xff]
      %v232 = vld [vmem:[#allocation2 + $0x10] sm:$0xff]
      %v233 = vld [vmem:[#allocation2 + $0x18] sm:$0xff]
      %v234 = vld [vmem:[#allocation2 + $0x20] sm:$0xff]
      %v235 = vld [vmem:[#allocation2 + $0x28] sm:$0xff]
      %v236 = vld [vmem:[#allocation2 + $0x30] sm:$0xff]
      %v237 = vld [vmem:[#allocation2 + $0x38] sm:$0xff]
      %v238 = vld [vmem:[#allocation2 + $0x40] sm:$0xff]
      %v239 = vld [vmem:[#allocation2 + $0x48] sm:$0xff]
      %v240 = vld [vmem:[#allocation2 + $0x50] sm:$0xff]
      %v241 = vld [vmem:[#allocation2 + $0x58] sm:$0xff]
      %v242 = vld [vmem:[#allocation2 + $0x60] sm:$0xff]
      %v243 = vld [vmem:[#allocation2 + $0x68] sm:$0xff]
      %v244 = vld [vmem:[#allocation2 + $0x70] sm:$0xff]
      %v245 = vld [vmem:[#allocation2 + $0x78] sm:$0xff]
      %v246 = vld [vmem:[%s2] sm:$0xff]
      %v247 = vld [vmem:[%s2 + $0x8] sm:$0xff]
      %v248 = vld [vmem:[%s2 + $0x10] sm:$0xff]
      %v249 = vld [vmem:[%s2 + $0x18] sm:$0xff]
      %v250 = vld [vmem:[%s2 + $0x20] sm:$0xff]
      %v251 = vld [vmem:[%s2 + $0x28] sm:$0xff]
      %v252 = vld [vmem:[%s2 + $0x30] sm:$0xff]
      %v253 = vld [vmem:[%s2 + $0x38] sm:$0xff]
      %v254 = vld [vmem:[%s2 + $0x40] sm:$0xff]
      %v255 = vld [vmem:[%s2 + $0x48] sm:$0xff]
      %v256 = vld [vmem:[%s2 + $0x50] sm:$0xff]
      %v257 = vld [vmem:[%s2 + $0x58] sm:$0xff]
      %v258 = vld [vmem:[%s2 + $0x60] sm:$0xff]
      %v259 = vld [vmem:[%s2 + $0x68] sm:$0xff]
      %v260 = vld [vmem:[%s2 + $0x70] sm:$0xff]
      %v261 = vld [vmem:[%s2 + $0x78] sm:$0xff]
      %263 = vset.pattern.permute.xlu0 0
      %264 = vperm.xlu0 %263, %v246
      %v265 = vpop.permute.xlu0 %264
      %268 = vset.pattern.permute.xlu0 0
      %269 = vperm.xlu0 %268, %v247
      %v270 = vpop.permute.xlu0 %269
      %273 = vset.pattern.permute.xlu0 0
      %274 = vperm.xlu0 %273, %v248
      %v275 = vpop.permute.xlu0 %274
      %278 = vset.pattern.permute.xlu0 0
      %279 = vperm.xlu0 %278, %v249
      %v280 = vpop.permute.xlu0 %279
      %283 = vset.pattern.permute.xlu0 0
      %284 = vperm.xlu0 %283, %v250
      %v285 = vpop.permute.xlu0 %284
      %288 = vset.pattern.permute.xlu0 0
      %289 = vperm.xlu0 %288, %v251
      %v290 = vpop.permute.xlu0 %289
      %293 = vset.pattern.permute.xlu0 0
      %294 = vperm.xlu0 %293, %v252
      %v295 = vpop.permute.xlu0 %294
      %298 = vset.pattern.permute.xlu0 0
      %299 = vperm.xlu0 %298, %v253
      %v300 = vpop.permute.xlu0 %299
      %303 = vset.pattern.permute.xlu0 0
      %304 = vperm.xlu0 %303, %v254
      %v305 = vpop.permute.xlu0 %304
      %308 = vset.pattern.permute.xlu0 0
      %309 = vperm.xlu0 %308, %v255
      %v310 = vpop.permute.xlu0 %309
      %313 = vset.pattern.permute.xlu0 0
      %314 = vperm.xlu0 %313, %v256
      %v315 = vpop.permute.xlu0 %314
      %318 = vset.pattern.permute.xlu0 0
      %319 = vperm.xlu0 %318, %v257
      %v320 = vpop.permute.xlu0 %319
      %323 = vset.pattern.permute.xlu0 0
      %324 = vperm.xlu0 %323, %v258
      %v325 = vpop.permute.xlu0 %324
      %328 = vset.pattern.permute.xlu0 0
      %329 = vperm.xlu0 %328, %v259
      %v330 = vpop.permute.xlu0 %329
      %333 = vset.pattern.permute.xlu0 0
      %334 = vperm.xlu0 %333, %v260
      %v335 = vpop.permute.xlu0 %334
      %338 = vset.pattern.permute.xlu0 0
      %339 = vperm.xlu0 %338, %v261
      %v340 = vpop.permute.xlu0 %339
      %v342 = vadd.f32 %v230, %v265
      %v343 = vadd.f32 %v231, %v270
      %v344 = vadd.f32 %v232, %v275
      %v345 = vadd.f32 %v233, %v280
      %v346 = vadd.f32 %v234, %v285
      %v347 = vadd.f32 %v235, %v290
      %v348 = vadd.f32 %v236, %v295
      %v349 = vadd.f32 %v237, %v300
      %v350 = vadd.f32 %v238, %v305
      %v351 = vadd.f32 %v239, %v310
      %v352 = vadd.f32 %v240, %v315
      %v353 = vadd.f32 %v241, %v320
      %v354 = vadd.f32 %v242, %v325
      %v355 = vadd.f32 %v243, %v330
      %v356 = vadd.f32 %v244, %v335
      %v357 = vadd.f32 %v245, %v340
      %v358 = vmax.f32 %v342, 0.0
      %v359 = vmax.f32 %v343, 0.0
      %v360 = vmax.f32 %v344, 0.0
      %v361 = vmax.f32 %v345, 0.0
      %v362 = vmax.f32 %v346, 0.0
      %v363 = vmax.f32 %v347, 0.0
      %v364 = vmax.f32 %v348, 0.0
      %v365 = vmax.f32 %v349, 0.0
      %v366 = vmax.f32 %v350, 0.0
      %v367 = vmax.f32 %v351, 0.0
      %v368 = vmax.f32 %v352, 0.0
      %v369 = vmax.f32 %v353, 0.0
      %v370 = vmax.f32 %v354, 0.0
      %v371 = vmax.f32 %v355, 0.0
      %v372 = vmax.f32 %v356, 0.0
      %v373 = vmax.f32 %v357, 0.0
      %v374 = vld [vmem:[%s3] sm:$0xff]
      %v375 = vld [vmem:[%s3 + $0x8] sm:$0xff]
      %v376 = vld [vmem:[%s3 + $0x10] sm:$0xff]
      %v377 = vld [vmem:[%s3 + $0x18] sm:$0xff]
      %v378 = vld [vmem:[%s3 + $0x20] sm:$0xff]
      %v379 = vld [vmem:[%s3 + $0x28] sm:$0xff]
      %v380 = vld [vmem:[%s3 + $0x30] sm:$0xff]
      %v381 = vld [vmem:[%s3 + $0x38] sm:$0xff]
      %v382 = vld [vmem:[%s3 + $0x40] sm:$0xff]
      %v383 = vld [vmem:[%s3 + $0x48] sm:$0xff]
      %v384 = vld [vmem:[%s3 + $0x50] sm:$0xff]
      %v385 = vld [vmem:[%s3 + $0x58] sm:$0xff]
      %v386 = vld [vmem:[%s3 + $0x60] sm:$0xff]
      %v387 = vld [vmem:[%s3 + $0x68] sm:$0xff]
      %v388 = vld [vmem:[%s3 + $0x70] sm:$0xff]
      %v389 = vld [vmem:[%s3 + $0x78] sm:$0xff]
      %391 = vset.pattern.permute.xlu0 0
      %392 = vperm.xlu0 %391, %v374
      %v393 = vpop.permute.xlu0 %392
      %396 = vset.pattern.permute.xlu0 0
      %397 = vperm.xlu0 %396, %v375
      %v398 = vpop.permute.xlu0 %397
      %401 = vset.pattern.permute.xlu0 0
      %402 = vperm.xlu0 %401, %v376
      %v403 = vpop.permute.xlu0 %402
      %406 = vset.pattern.permute.xlu0 0
      %407 = vperm.xlu0 %406, %v377
      %v408 = vpop.permute.xlu0 %407
      %411 = vset.pattern.permute.xlu0 0
      %412 = vperm.xlu0 %411, %v378
      %v413 = vpop.permute.xlu0 %412
      %416 = vset.pattern.permute.xlu0 0
      %417 = vperm.xlu0 %416, %v379
      %v418 = vpop.permute.xlu0 %417
      %421 = vset.pattern.permute.xlu0 0
      %422 = vperm.xlu0 %421, %v380
      %v423 = vpop.permute.xlu0 %422
      %426 = vset.pattern.permute.xlu0 0
      %427 = vperm.xlu0 %426, %v381
      %v428 = vpop.permute.xlu0 %427
      %431 = vset.pattern.permute.xlu0 0
      %432 = vperm.xlu0 %431, %v382
      %v433 = vpop.permute.xlu0 %432
      %436 = vset.pattern.permute.xlu0 0
      %437 = vperm.xlu0 %436, %v383
      %v438 = vpop.permute.xlu0 %437
      %441 = vset.pattern.permute.xlu0 0
      %442 = vperm.xlu0 %441, %v384
      %v443 = vpop.permute.xlu0 %442
      %446 = vset.pattern.permute.xlu0 0
      %447 = vperm.xlu0 %446, %v385
      %v448 = vpop.permute.xlu0 %447
      %451 = vset.pattern.permute.xlu0 0
      %452 = vperm.xlu0 %451, %v386
      %v453 = vpop.permute.xlu0 %452
      %456 = vset.pattern.permute.xlu0 0
      %457 = vperm.xlu0 %456, %v387
      %v458 = vpop.permute.xlu0 %457
      %461 = vset.pattern.permute.xlu0 0
      %462 = vperm.xlu0 %461, %v388
      %v463 = vpop.permute.xlu0 %462
      %466 = vset.pattern.permute.xlu0 0
      %467 = vperm.xlu0 %466, %v389
      %v468 = vpop.permute.xlu0 %467
      %v470 = vmul.f32 %v358, %v393
      %v471 = vmul.f32 %v359, %v398
      %v472 = vmul.f32 %v360, %v403
      %v473 = vmul.f32 %v361, %v408
      %v474 = vmul.f32 %v362, %v413
      %v475 = vmul.f32 %v363, %v418
      %v476 = vmul.f32 %v364, %v423
      %v477 = vmul.f32 %v365, %v428
      %v478 = vmul.f32 %v366, %v433
      %v479 = vmul.f32 %v367, %v438
      %v480 = vmul.f32 %v368, %v443
      %v481 = vmul.f32 %v369, %v448
      %v482 = vmul.f32 %v370, %v453
      %v483 = vmul.f32 %v371, %v458
      %v484 = vmul.f32 %v372, %v463
      %v485 = vmul.f32 %v373, %v468
      %v486 = vsel %vm210, %v470, 0.0
      %v487 = vsel %vm210, %v471, 0.0
      %v488 = vadd.f32 %v486, %v487
      %v489 = vsel %vm210, %v472, 0.0
      %v490 = vadd.f32 %v488, %v489
      %v491 = vsel %vm210, %v473, 0.0
      %v492 = vadd.f32 %v490, %v491
      %v493 = vsel %vm210, %v474, 0.0
      %v494 = vadd.f32 %v492, %v493
      %v495 = vsel %vm210, %v475, 0.0
      %v496 = vadd.f32 %v494, %v495
      %v497 = vsel %vm210, %v476, 0.0
      %v498 = vadd.f32 %v496, %v497
      %v499 = vsel %vm210, %v477, 0.0
      %v500 = vadd.f32 %v498, %v499
      %v501 = vsel %vm210, %v478, 0.0
      %v502 = vadd.f32 %v500, %v501
      %v503 = vsel %vm210, %v479, 0.0
      %v504 = vadd.f32 %v502, %v503
      %v505 = vsel %vm210, %v480, 0.0
      %v506 = vadd.f32 %v504, %v505
      %v507 = vsel %vm210, %v481, 0.0
      %v508 = vadd.f32 %v506, %v507
      %v509 = vsel %vm210, %v482, 0.0
      %v510 = vadd.f32 %v508, %v509
      %v511 = vsel %vm210, %v483, 0.0
      %v512 = vadd.f32 %v510, %v511
      %v513 = vsel %vm210, %v484, 0.0
      %v514 = vadd.f32 %v512, %v513
      %v515 = vsel %vm210, %v485, 0.0
      %v516 = vadd.f32 %v514, %v515
      %v517 = vrot.slane %v516, 4
      %v518 = vadd.f32 %v516, %v517
      %v519 = vrot.slane %v518, 2
      %v520 = vadd.f32 %v518, %v519
      %v521 = vrot.slane %v520, 1
      %v522 = vadd.f32 %v520, %v521
      %s523 = sld [smem:[#allocation3]]
      %v524 = vstv %s523
      %v525 = vadd.f32 %v522, %v524
      %vm526 = vcmask 57344
      %527 = vst.msk [vmem:[#allocation4] sm:$0x1] %vm526, %v525
    $region29: #{tpu_custom_call.1} parent=1 // pred_fallthru
      _
    // Predicated region
    $region30: #{tpu_custom_call.1} parent=1 // pred_check
      _
    $region31: #{tpu_custom_call.1} parent=1 // pred_check_branch
      %529 = sbr.rel (0) target = $region33
    $region32: #{tpu_custom_call.1} parent=1 // pred_region
      %531 = vsyncadd [#allocation5], 0
      %s533 = sshll.u32 [#allocation4], 4
      %s534 = int_to_ptr.vmem [resolvable:$true] %s533
      %s535 = sshll.u32 %s5, 4
      %s536 = int_to_ptr.hbm [resolvable:$true] %s535
      %538 = dma.vmem_to_hbm [thread:$0]  %s534, 16, %s536, [#allocation5]
    $region33: #{tpu_custom_call.1} parent=1 // pred_fallthru
      _
    // Predicated region
    $region34: #{tpu_custom_call.1} parent=1 // pred_check
      _
    $region35: #{tpu_custom_call.1} parent=1 // pred_check_branch
      %540 = sbr.rel (0) target = $region37
    $region36: #{tpu_custom_call.1} parent=1 // pred_region
      %542 = dma.done [#allocation5], 16
    $region37: #{tpu_custom_call.1} parent=1 // pred_fallthru
      _
    %543 = vsyncpa [#allocation5], 1

</llo_original>
